<compile_context>
chip_gen: v6e
topology: v6e:2x2x1
jax: 0.10.0
libtpu: 0.0.40
codegen_flags: <defaults>
</compile_context>

<pallas_src>
import math

import jax
import jax.numpy as jnp
from jax.experimental import pallas as pl
from jax.experimental.pallas import tpu as pltpu


def _round_up(x: int, m: int) -> int:
    return ((x + m - 1) // m) * m


def _pad_to(a, shape):
    pads = tuple((0, t - s) for s, t in zip(a.shape, shape))
    if all(p == (0, 0) for p in pads):
        return a                      # skip the extra HBM copy when aligned
    return jnp.pad(a, pads)


def _lrt_kernel(x_ref, wT_ref, wvarT_ref, bias_ref, noise_ref, o_ref,
                mean_acc, var_acc):
    """One (tm, tn) output tile; K is accumulated over grid axis 2."""
    k = pl.program_id(2)

    @pl.when(k == 0)
    def _init():
        mean_acc[...] = jnp.zeros_like(mean_acc)
        var_acc[...] = jnp.zeros_like(var_acc)

    x = x_ref[...]                                    # (tm, tk) storage dtype
    mean_acc[...] += jnp.dot(x, wT_ref[...],
                             preferred_element_type=jnp.float32)
    # square in the storage dtype (exact for f32; bf16 VALU on v6e/v7x)
    var_acc[...] += jnp.dot(x * x, wvarT_ref[...],
                            preferred_element_type=jnp.float32)

    @pl.when(k == pl.num_programs(2) - 1)
    def _finalize():
        mean = mean_acc[...] + bias_ref[...]
        var = jnp.maximum(var_acc[...], 0.0)
        o_ref[...] = (mean + jnp.sqrt(var) * noise_ref[...]).astype(o_ref.dtype)


def _vmem_limit_bytes(tm, tn, tk, op_bytes):
    # double-buffered inputs + output + accumulators, plus margin
    need = (2 * (tm * tk + 2 * tk * tn) * op_bytes    # x, wT, wvarT tiles
            + 2 * tn * 4                              # bias tile
            + 2 * tm * tn * 4                         # noise tile
            + 2 * tm * tn * 4                         # output tile
            + 2 * tm * tn * 4)                        # f32 accumulators
    budget = int(need * 1.5) + (4 << 20)
    cap = 96 << 20                                    # safe on v5e/v6e
    try:                                              # generation-aware cap
        info = pltpu.get_tpu_info()
        phys = int(getattr(info, "vmem_capacity_bytes", cap))
        cap = max(32 << 20, phys - (16 << 20))        # leave compiler headroom
    except Exception:
        pass
    return int(min(max(budget, 32 << 20), cap))


def variational_lrt_linear(x, w_mean, w_logvar, bias, *, noise=None, key=None,
                           tm=256, tn=256, tk=1024, use_bf16=False,
                           out_dtype=None):
    """Fused Variational_LRT forward for an nn.Linear.

    x: (M, K); w_mean, w_logvar: (N, K); bias: (N,) or None.
    noise: optional pre-drawn (M, N) N(0,1) tensor (testing); otherwise drawn
    from `key` (default PRNGKey(0)) in the wrapper.
    """
    M, K = x.shape
    N, K2 = w_mean.shape
    assert K2 == K
    if bias is None:
        bias = jnp.zeros((N,), jnp.float32)
    if noise is None:
        if key is None:
            key = jax.random.PRNGKey(0)
        noise = jax.random.normal(key, (M, N), dtype=jnp.float32)
    out_dtype = x.dtype if out_dtype is None else out_dtype

    op_dtype = jnp.bfloat16 if use_bf16 else jnp.float32
    op_bytes = 2 if use_bf16 else 4

    # ---- hoisted, loop-invariant precompute (f32) ---------------------------
    wT = jnp.transpose(w_mean).astype(jnp.float32)                   # (K, N)
    wvarT = jnp.exp(jnp.transpose(w_logvar).astype(jnp.float32)) * (wT * wT)

    # ---- tile sizes / padding -----------------------------------------------
    tm = max(16, min(tm, _round_up(M, 16)))
    tn = max(128, min(tn, _round_up(N, 128)))
    tk = max(128, min(tk, _round_up(K, 128)))
    assert tm % 8 == 0 and tn % 128 == 0 and tk % 128 == 0

    m_tiles, n_tiles, k_tiles = pl.cdiv(M, tm), pl.cdiv(N, tn), pl.cdiv(K, tk)
    Mp, Np, Kp = m_tiles * tm, n_tiles * tn, k_tiles * tk

    xp = _pad_to(x.astype(op_dtype), (Mp, Kp))
    wTp = _pad_to(wT.astype(op_dtype), (Kp, Np))
    wvarTp = _pad_to(wvarT.astype(op_dtype), (Kp, Np))
    biasp = _pad_to(bias.astype(jnp.float32).reshape(1, N), (1, Np))
    noisep = _pad_to(noise.astype(jnp.float32), (Mp, Np))

    # ---- grid nesting: re-stream the smaller operand ------------------------
    x_bytes = Mp * Kp * op_bytes
    w_bytes = 2 * Kp * Np * op_bytes
    if x_bytes >= w_bytes:
        # x resident-ish (M outer), weight tiles re-streamed per M tile
        grid = (m_tiles, n_tiles, k_tiles)
        x_map = lambda i, j, k: (i, k)
        w_map = lambda i, j, k: (k, j)
        b_map = lambda i, j, k: (0, j)
        o_map = lambda i, j, k: (i, j)
    else:
        # weights resident-ish (N outer), x re-streamed per N tile
        grid = (n_tiles, m_tiles, k_tiles)
        x_map = lambda j, i, k: (i, k)
        w_map = lambda j, i, k: (k, j)
        b_map = lambda j, i, k: (0, j)
        o_map = lambda j, i, k: (i, j)

    in_specs = [
        pl.BlockSpec((tm, tk), x_map),
        pl.BlockSpec((tk, tn), w_map),
        pl.BlockSpec((tk, tn), w_map),
        pl.BlockSpec((1, tn), b_map),
        pl.BlockSpec((tm, tn), o_map),     # noise: resident across K
    ]
    out_spec = pl.BlockSpec((tm, tn), o_map)

    out = pl.pallas_call(
        _lrt_kernel,
        out_shape=jax.ShapeDtypeStruct((Mp, Np), out_dtype),
        grid_spec=pltpu.PrefetchScalarGridSpec(
            num_scalar_prefetch=0,
            grid=grid,
            in_specs=in_specs,
            out_specs=out_spec,
            scratch_shapes=[pltpu.VMEM((tm, tn), jnp.float32),
                            pltpu.VMEM((tm, tn), jnp.float32)],
        ),
        compiler_params=pltpu.CompilerParams(
            dimension_semantics=("parallel", "parallel", "arbitrary"),
            vmem_limit_bytes=_vmem_limit_bytes(tm, tn, tk, op_bytes),
        ),
    )(xp, wTp, wvarTp, biasp, noisep)

    if Mp == M and Np == N:
        return out
    return out[:M, :N]


def variational_lrt_linear_ref(x, w_mean, w_logvar, bias, noise):
    """Pure-JAX reference (high-precision matmuls)."""
    hi = jax.lax.Precision.HIGHEST
    mean = jnp.dot(x, w_mean.T, precision=hi) + bias
    w_var = jnp.exp(w_logvar) * jnp.square(w_mean)
    var = jnp.dot(jnp.square(x), w_var.T, precision=hi)
    return mean + jnp.sqrt(var) * noise


if __name__ == "__main__":
    # Wrapped module: nn.Linear(in_features=200, out_features=192), batch=40.
    # Small shapes, but chosen so that with small tiles the kernel exercises
    # M/N/K padding, a multi-tile (3 x 2 x 2) grid and K accumulation.
    batch, in_features, out_features = 40, 200, 192

    key = jax.random.PRNGKey(0)
    kx, kw, kb, kn, ke = jax.random.split(key, 5)

    # nn.Linear default init: uniform(-1/sqrt(K), 1/sqrt(K)).
    bound = 1.0 / math.sqrt(in_features)
    w_mean = jax.random.uniform(kw, (out_features, in_features),
                                minval=-bound, maxval=bound, dtype=jnp.float32)
    bias = jax.random.uniform(kb, (out_features,),
                              minval=-bound, maxval=bound, dtype=jnp.float32)
    # weight_logvar init: log(1 / prod(W.shape[1:])) = log(1 / in_features)
    w_logvar = jnp.full((out_features, in_features),
                        math.log(1.0 / in_features), dtype=jnp.float32)
    x = jax.random.normal(kx, (batch, in_features), dtype=jnp.float32)
    noise = jax.random.normal(kn, (batch, out_features), dtype=jnp.float32)

    ref = variational_lrt_linear_ref(x, w_mean, w_logvar, bias, noise)

    # --- check 1: f32 path, small tiles -> multi-tile grid + K accumulation --
    out_small = jax.block_until_ready(
        variational_lrt_linear(x, w_mean, w_logvar, bias, noise=noise,
                               tm=16, tn=128, tk=128, use_bf16=False))
    assert out_small.shape == (batch, out_features)
    assert bool(jnp.allclose(out_small, ref, atol=1e-4, rtol=1e-4)), \
        "f32 multi-tile kernel mismatch vs reference"

    # --- check 2: f32 path, default (single-tile) sizes ----------------------
    out_f32 = jax.block_until_ready(
        variational_lrt_linear(x, w_mean, w_logvar, bias, noise=noise,
                               use_bf16=False))
    assert bool(jnp.allclose(out_f32, ref, atol=1e-4, rtol=1e-4)), \
        "f32 default-tile kernel mismatch vs reference"

    # --- check 3: bf16 MXU path (loose tolerance) ----------------------------
    out_bf16 = jax.block_until_ready(
        variational_lrt_linear(x, w_mean, w_logvar, bias, noise=noise,
                               use_bf16=True))
    assert bool(jnp.allclose(out_bf16, ref, atol=5e-2, rtol=5e-2)), \
        "bf16 kernel mismatch vs reference"

    # --- check 4: production path, noise drawn inside the wrapper -----------
    out_a = jax.block_until_ready(
        variational_lrt_linear(x, w_mean, w_logvar, bias, key=ke))
    out_b = jax.block_until_ready(
        variational_lrt_linear(x, w_mean, w_logvar, bias, key=ke))
    assert out_a.shape == (batch, out_features)
    assert bool(jnp.array_equal(out_a, out_b)), "noise not deterministic per key"
    hi = jax.lax.Precision.HIGHEST
    mean_ref = jnp.dot(x, w_mean.T, precision=hi) + bias
    var_ref = jnp.dot(jnp.square(x),
                      (jnp.exp(w_logvar) * jnp.square(w_mean)).T, precision=hi)
    eps_rec = (out_a - mean_ref) / jnp.sqrt(var_ref)
    assert bool(jnp.all(jnp.isfinite(eps_rec)))
    assert abs(float(jnp.mean(eps_rec))) < 0.1, "recovered noise mean off"
    assert abs(float(jnp.std(eps_rec)) - 1.0) < 0.1, "recovered noise std off"

    print("KERNEL_OK")
</pallas_src>

<mosaic_0001>
module attributes {stable_mosaic.version = 11 : i64} {
  func.func @_lrt_kernel(%arg0: i32, %arg1: i32, %arg2: i32, %arg3: memref<16x128xf32, #tpu.memory_space<vmem>>, %arg4: memref<128x128xf32, #tpu.memory_space<vmem>>, %arg5: memref<128x128xf32, #tpu.memory_space<vmem>>, %arg6: memref<1x128xf32, #tpu.memory_space<vmem>>, %arg7: memref<16x128xf32, #tpu.memory_space<vmem>>, %arg8: memref<16x128xf32, #tpu.memory_space<vmem>>, %arg9: memref<16x128xf32, #tpu.memory_space<vmem>>, %arg10: memref<16x128xf32, #tpu.memory_space<vmem>>) attributes {dimension_semantics = [#tpu.dimension_semantics<parallel>, #tpu.dimension_semantics<parallel>, #tpu.dimension_semantics<arbitrary>], iteration_bounds = array<i64: 2, 3, 2>, scalar_prefetch = 0 : i64, scratch_operands = 2 : i64, tpu.core_type = #tpu.core_type<tc>, window_params = [{transform_indices = @transform_0, window_bounds = array<i64: 16, 128>}, {transform_indices = @transform_1, window_bounds = array<i64: 128, 128>}, {transform_indices = @transform_2, window_bounds = array<i64: 128, 128>}, {transform_indices = @transform_3, window_bounds = array<i64: 1, 128>}, {transform_indices = @transform_4, window_bounds = array<i64: 16, 128>}, {transform_indices = @transform_5, window_bounds = array<i64: 16, 128>}]} {
    %c0_i32 = arith.constant 0 : i32
    %0 = arith.cmpi eq, %arg2, %c0_i32 : i32
    %1 = arith.extui %0 : i1 to i32
    %c0_i32_0 = arith.constant 0 : i32
    %2 = arith.cmpi ne, %1, %c0_i32_0 : i32
    scf.if %2 {
      %cst_16 = arith.constant 0.000000e+00 : f32
      %18 = vector.broadcast %cst_16 : f32 to vector<16x128xf32>
      %c0_17 = arith.constant 0 : index
      %c0_18 = arith.constant 0 : index
      %19 = vector.load %arg9[%c0_17, %c0_18] : memref<16x128xf32, #tpu.memory_space<vmem>>, vector<16x128xf32>
      tpu.vector_store %arg9[%c0_17, %c0_18], %18 {strides = array<i32>} : memref<16x128xf32, #tpu.memory_space<vmem>>, vector<16x128xf32>,
      %cst_19 = arith.constant 0.000000e+00 : f32
      %20 = vector.broadcast %cst_19 : f32 to vector<16x128xf32>
      %c0_20 = arith.constant 0 : index
      %c0_21 = arith.constant 0 : index
      %21 = vector.load %arg10[%c0_20, %c0_21] : memref<16x128xf32, #tpu.memory_space<vmem>>, vector<16x128xf32>
      tpu.vector_store %arg10[%c0_20, %c0_21], %20 {strides = array<i32>} : memref<16x128xf32, #tpu.memory_space<vmem>>, vector<16x128xf32>,
    } else {
    }
    %c0 = arith.constant 0 : index
    %c0_1 = arith.constant 0 : index
    %3 = vector.load %arg3[%c0, %c0_1] : memref<16x128xf32, #tpu.memory_space<vmem>>, vector<16x128xf32>
    %c0_2 = arith.constant 0 : index
    %c0_3 = arith.constant 0 : index
    %4 = vector.load %arg9[%c0_2, %c0_3] : memref<16x128xf32, #tpu.memory_space<vmem>>, vector<16x128xf32>
    %c0_4 = arith.constant 0 : index
    %c0_5 = arith.constant 0 : index
    %5 = vector.load %arg4[%c0_4, %c0_5] : memref<128x128xf32, #tpu.memory_space<vmem>>, vector<128x128xf32>
    %cst = arith.constant dense<0.000000e+00> : vector<16x128xf32>
    %6 = tpu.matmul %3, %5, %cst {dimension_numbers = #tpu.dot_dimension_numbers<[1], [0], [0], [1], [0, 0, 1, 1], [], []>} : vector<16x128xf32>, vector<128x128xf32>, vector<16x128xf32> -> vector<16x128xf32>
    %7 = arith.addf %4, %6 : vector<16x128xf32>
    %c0_6 = arith.constant 0 : index
    %c0_7 = arith.constant 0 : index
    %8 = vector.load %arg9[%c0_6, %c0_7] : memref<16x128xf32, #tpu.memory_space<vmem>>, vector<16x128xf32>
    tpu.vector_store %arg9[%c0_6, %c0_7], %7 {strides = array<i32>} : memref<16x128xf32, #tpu.memory_space<vmem>>, vector<16x128xf32>,
    %c0_8 = arith.constant 0 : index
    %c0_9 = arith.constant 0 : index
    %9 = vector.load %arg10[%c0_8, %c0_9] : memref<16x128xf32, #tpu.memory_space<vmem>>, vector<16x128xf32>
    %10 = arith.mulf %3, %3 : vector<16x128xf32>
    %c0_10 = arith.constant 0 : index
    %c0_11 = arith.constant 0 : index
    %11 = vector.load %arg5[%c0_10, %c0_11] : memref<128x128xf32, #tpu.memory_space<vmem>>, vector<128x128xf32>
    %cst_12 = arith.constant dense<0.000000e+00> : vector<16x128xf32>
    %12 = tpu.matmul %10, %11, %cst_12 {dimension_numbers = #tpu.dot_dimension_numbers<[1], [0], [0], [1], [0, 0, 1, 1], [], []>} : vector<16x128xf32>, vector<128x128xf32>, vector<16x128xf32> -> vector<16x128xf32>
    %13 = arith.addf %9, %12 : vector<16x128xf32>
    %c0_13 = arith.constant 0 : index
    %c0_14 = arith.constant 0 : index
    %14 = vector.load %arg10[%c0_13, %c0_14] : memref<16x128xf32, #tpu.memory_space<vmem>>, vector<16x128xf32>
    tpu.vector_store %arg10[%c0_13, %c0_14], %13 {strides = array<i32>} : memref<16x128xf32, #tpu.memory_space<vmem>>, vector<16x128xf32>,
    %c1_i32 = arith.constant 1 : i32
    %15 = arith.cmpi eq, %arg2, %c1_i32 : i32
    %16 = arith.extui %15 : i1 to i32
    %c0_i32_15 = arith.constant 0 : i32
    %17 = arith.cmpi ne, %16, %c0_i32_15 : i32
    scf.if %17 {
      %c0_16 = arith.constant 0 : index
      %c0_17 = arith.constant 0 : index
      %18 = vector.load %arg9[%c0_16, %c0_17] : memref<16x128xf32, #tpu.memory_space<vmem>>, vector<16x128xf32>
      %c0_18 = arith.constant 0 : index
      %c0_19 = arith.constant 0 : index
      %19 = vector.load %arg6[%c0_18, %c0_19] : memref<1x128xf32, #tpu.memory_space<vmem>>, vector<1x128xf32>
      %20 = vector.broadcast %19 : vector<1x128xf32> to vector<16x128xf32>
      %21 = arith.addf %18, %20 : vector<16x128xf32>
      %c0_20 = arith.constant 0 : index
      %c0_21 = arith.constant 0 : index
      %22 = vector.load %arg10[%c0_20, %c0_21] : memref<16x128xf32, #tpu.memory_space<vmem>>, vector<16x128xf32>
      %cst_22 = arith.constant 0.000000e+00 : f32
      %23 = vector.broadcast %cst_22 : f32 to vector<16x128xf32>
      %24 = arith.maximumf %22, %23 : vector<16x128xf32>
      %25 = math.sqrt %24 : vector<16x128xf32>
      %c0_23 = arith.constant 0 : index
      %c0_24 = arith.constant 0 : index
      %26 = vector.load %arg7[%c0_23, %c0_24] : memref<16x128xf32, #tpu.memory_space<vmem>>, vector<16x128xf32>
      %27 = arith.mulf %25, %26 : vector<16x128xf32>
      %28 = arith.addf %21, %27 : vector<16x128xf32>
      %c0_25 = arith.constant 0 : index
      %c0_26 = arith.constant 0 : index
      %29 = vector.load %arg8[%c0_25, %c0_26] : memref<16x128xf32, #tpu.memory_space<vmem>>, vector<16x128xf32>
      tpu.vector_store %arg8[%c0_25, %c0_26], %28 {strides = array<i32>} : memref<16x128xf32, #tpu.memory_space<vmem>>, vector<16x128xf32>,
    } else {
    }
    return
  }
  func.func @transform_0(%arg0: i32, %arg1: i32, %arg2: i32) -> (i32, i32) {
    %c0_i32 = arith.constant 0 : i32
    return %arg1, %arg2 : i32, i32
  }
  func.func @transform_1(%arg0: i32, %arg1: i32, %arg2: i32) -> (i32, i32) {
    %c0_i32 = arith.constant 0 : i32
    return %arg2, %arg0 : i32, i32
  }
  func.func @transform_2(%arg0: i32, %arg1: i32, %arg2: i32) -> (i32, i32) {
    %c0_i32 = arith.constant 0 : i32
    return %arg2, %arg0 : i32, i32
  }
  func.func @transform_3(%arg0: i32, %arg1: i32, %arg2: i32) -> (i32, i32) {
    %c0_i32 = arith.constant 0 : i32
    %c0_i32_0 = arith.constant 0 : i32
    return %c0_i32, %arg0 : i32, i32
  }
  func.func @transform_4(%arg0: i32, %arg1: i32, %arg2: i32) -> (i32, i32) {
    %c0_i32 = arith.constant 0 : i32
    return %arg1, %arg0 : i32, i32
  }
  func.func @transform_5(%arg0: i32, %arg1: i32, %arg2: i32) -> (i32, i32) {
    %c0_i32 = arith.constant 0 : i32
    return %arg1, %arg0 : i32, i32
  }
}

</mosaic_0001>

<llo_original>
// kernel: tpu_custom_call.1
$region0: #{tpu_custom_call.1}
  #allocation0 [shape = 'u32[]', space=smem, size = 0x4, offset = 0x4, fixed_abs, tag = 'smem constant byte address 0x4 - core index']
  #allocation1 [shape = 'u32[144,128]{1,0:T(1,128)}', space=vmem, size = 0x12000, scoped, tag = 'internal scratch']
  #allocation2 [shape = 'f32[16,128]{1,0:T(8,128)}', space=vmem, size = 0x2000, scoped, tag = 'scratch operand']
  #allocation3 [shape = 'f32[16,128]{1,0:T(8,128)}', space=vmem, size = 0x2000, scoped, tag = 'scratch operand']
  %s0 = inlined_call_operand.hbm [shape: f32[48,256], index: 0, kind: input, shape index: {}]
  %s1 = inlined_call_operand.hbm [shape: f32[256,256], index: 1, kind: input, shape index: {}]
  %s2 = inlined_call_operand.hbm [shape: f32[256,256], index: 2, kind: input, shape index: {}]
  %s3 = inlined_call_operand.vmem [shape: f32[1,256], index: 3, kind: input, shape index: {}]
  %s4 = inlined_call_operand.hbm [shape: f32[48,256], index: 4, kind: input, shape index: {}]
  %s5 = inlined_call_operand.hbm [shape: f32[48,256], index: 5, kind: output, shape index: {}]
  %s6 = sld [smem:[#allocation0]]
  $region77: #{tpu_custom_call.1} parent=0
    _
  %s8 = ssub.s32 1, %s6
  %s9 = scalar_select 0, %s8, %s6
  $region1: #{tpu_custom_call.1} parent=0
    #allocation4 [shape = 'u8[16384]{0}', space=vmem, size = 0x4000, scoped, tag = 'input window, operand 0']
    #allocation5 [shape = 's32[2]{0}', space=sflag, size = 0x8, scoped, tag = 'scoped memory for tpu_custom_call.1']
    #allocation6 [shape = 's32[2]{0}', space=sflag, size = 0x8, scoped, tag = 'scoped memory for tpu_custom_call.1']
    #allocation7 [shape = 'u8[131072]{0}', space=vmem, size = 0x20000, scoped, tag = 'input window, operand 1']
    #allocation8 [shape = 's32[2]{0}', space=sflag, size = 0x8, scoped, tag = 'scoped memory for tpu_custom_call.1']
    #allocation9 [shape = 'u8[131072]{0}', space=vmem, size = 0x20000, scoped, tag = 'input window, operand 2']
    #allocation10 [shape = 'u8[16384]{0}', space=vmem, size = 0x4000, scoped, tag = 'input window, operand 4']
    #allocation11 [shape = 's32[2]{0}', space=sflag, size = 0x8, scoped, tag = 'scoped memory for tpu_custom_call.1']
    #allocation12 [shape = 'u8[16384]{0}', space=vmem, size = 0x4000, scoped, tag = 'output window, operand 0']
    %10 = vsyncpa [#allocation5], 0
    %s11 = scalar_lea.sflag [#allocation5], 1
    %12 = vsyncpa %s11, 0
    %13 = vsyncpa [#allocation8], 0
    %s14 = scalar_lea.sflag [#allocation8], 1
    %15 = vsyncpa %s14, 0
    %16 = vsyncpa [#allocation11], 0
    %s17 = scalar_lea.sflag [#allocation11], 1
    %18 = vsyncpa %s17, 0
    %19 = vsyncpa [#allocation6], 0
    %s20 = scalar_lea.sflag [#allocation6], 1
    %21 = vsyncpa %s20, 0
    loop: start=0, step=1, limit=14
    $region2: #{tpu_custom_call.1} parent=1 // loop_pre_header
      _
    $region3: #{tpu_custom_call.1} parent=1 // loop_header
      %s23 = sphi 0, %s27
      %p24 = scmp.ge.s32.totalorder %s23, 14
      %s30 = sphi 0, %s49
      %s31 = sphi 0, %s45
      %s32 = sphi 0, %s41
      %s33 = sphi 0, %s30
      %s34 = sphi 0, %s31
      %s35 = sphi 0, %s32
      %s36 = sphi 0, %s33
      %s37 = sphi 0, %s34
      %s38 = sphi 0, %s35
      %s54 = sphi 0, %s56
      %s57 = sphi 0, %s54
      %s58 = sphi 0, %s57
      %s74 = sphi 0, %s58
      %s82 = sphi 0, %s84
      %s85 = sphi 0, %s82
      %s86 = sphi 0, %s85
      %s102 = sphi 0, %s86
      %s110 = sphi 0, %s112
      %s113 = sphi 0, %s110
      %s114 = sphi 0, %s113
      %s130 = sphi 0, %s114
      %s136 = sphi 0, %s138
      %s139 = sphi 0, %s136
      %s140 = sphi 0, %s139
      %s156 = sphi 0, %s140
      %s164 = sphi 0, %s166
      %s167 = sphi 0, %s164
      %s168 = sphi 0, %s167
      %s184 = sphi 0, %s168
      %s192 = sphi 0, %s194
      %s195 = sphi 0, %s192
      %s196 = sphi 0, %s195
      %s212 = sphi 0, %s196
    $region4: #{tpu_custom_call.1} parent=1 // loop_header_branch
      %26 = sbr.rel (%p24) target = $region8
    $region5: #{tpu_custom_call.1} parent=1 // loop_body
      %s28 = ssub.s32 %s23, 1
      %s29 = ssub.s32 %s23, 2
      %s39 = sadd.s32 1, %s32
      %p40 = scmp.ge.s32.totalorder %s39, 2
      %s41 = scalar_select %p40, 0, %s39
      %s42 = sadd.s32 1, %s31
      %s43 = scalar_select %p40, %s42, %s31
      %p44 = scmp.ge.s32.totalorder %s43, 3
      %s45 = scalar_select %p44, 0, %s43
      %s46 = sadd.s32 1, %s30
      %s47 = scalar_select %p44, %s46, %s30
      %p48 = scmp.ge.s32.totalorder %s47, 2
      %s49 = scalar_select %p48, 0, %s47
      %s50 = ssub.s32 %s31, %s45
      %s51 = ssub.s32 %s32, %s41
      %s52 = sor.u32 %s50, %s51
      %p53 = scmp.eq.s32.totalorder %s52, 0
      %s55 = sadd.s32 %s54, 1
      %s56 = scalar_select %p53, %s54, %s55
      %p59 = pneg %p53
      %p60 = scmp.eq.s32.totalorder %s23, 11
      %p61 = por %p59, %p60
      %p62 = scmp.ne.s32.totalorder %s54, %s57
      %p63 = scmp.eq.s32.totalorder %s23, 0
      %p64 = por %p62, %p63
      %p65 = scmp.ne.s32.totalorder %s54, %s57
      %p66 = scmp.eq.s32.totalorder %s28, 11
      %p67 = por %p65, %p66
      %p68 = scmp.ne.s32.totalorder %s57, %s58
      %p69 = scmp.eq.s32.totalorder %s28, 0
      %p70 = por %p68, %p69
      %p71 = scmp.ne.s32.totalorder %s57, %s58
      %p72 = scmp.eq.s32.totalorder %s29, 11
      %p73 = por %p71, %p72
      %p75 = scmp.ne.s32.totalorder %s58, %s74
      %p76 = scmp.eq.s32.totalorder %s29, 0
      %p77 = por %p75, %p76
      %s78 = ssub.s32 %s32, %s41
      %s79 = ssub.s32 %s30, %s49
      %s80 = sor.u32 %s78, %s79
      %p81 = scmp.eq.s32.totalorder %s80, 0
      %s83 = sadd.s32 %s82, 1
      %s84 = scalar_select %p81, %s82, %s83
      %p87 = pneg %p81
      %p88 = scmp.eq.s32.totalorder %s23, 11
      %p89 = por %p87, %p88
      %p90 = scmp.ne.s32.totalorder %s82, %s85
      %p91 = scmp.eq.s32.totalorder %s23, 0
      %p92 = por %p90, %p91
      %p93 = scmp.ne.s32.totalorder %s82, %s85
      %p94 = scmp.eq.s32.totalorder %s28, 11
      %p95 = por %p93, %p94
      %p96 = scmp.ne.s32.totalorder %s85, %s86
      %p97 = scmp.eq.s32.totalorder %s28, 0
      %p98 = por %p96, %p97
      %p99 = scmp.ne.s32.totalorder %s85, %s86
      %p100 = scmp.eq.s32.totalorder %s29, 11
      %p101 = por %p99, %p100
      %p103 = scmp.ne.s32.totalorder %s86, %s102
      %p104 = scmp.eq.s32.totalorder %s29, 0
      %p105 = por %p103, %p104
      %s106 = ssub.s32 %s32, %s41
      %s107 = ssub.s32 %s30, %s49
      %s108 = sor.u32 %s106, %s107
      %p109 = scmp.eq.s32.totalorder %s108, 0
      %s111 = sadd.s32 %s110, 1
      %s112 = scalar_select %p109, %s110, %s111
      %p115 = pneg %p109
      %p116 = scmp.eq.s32.totalorder %s23, 11
      %p117 = por %p115, %p116
      %p118 = scmp.ne.s32.totalorder %s110, %s113
      %p119 = scmp.eq.s32.totalorder %s23, 0
      %p120 = por %p118, %p119
      %p121 = scmp.ne.s32.totalorder %s110, %s113
      %p122 = scmp.eq.s32.totalorder %s28, 11
      %p123 = por %p121, %p122
      %p124 = scmp.ne.s32.totalorder %s113, %s114
      %p125 = scmp.eq.s32.totalorder %s28, 0
      %p126 = por %p124, %p125
      %p127 = scmp.ne.s32.totalorder %s113, %s114
      %p128 = scmp.eq.s32.totalorder %s29, 11
      %p129 = por %p127, %p128
      %p131 = scmp.ne.s32.totalorder %s114, %s130
      %p132 = scmp.eq.s32.totalorder %s29, 0
      %p133 = por %p131, %p132
      %s134 = ssub.s32 %s30, %s49
      %p135 = scmp.eq.s32.totalorder %s134, 0
      %s137 = sadd.s32 %s136, 1
      %s138 = scalar_select %p135, %s136, %s137
      %p141 = pneg %p135
      %p142 = scmp.eq.s32.totalorder %s23, 11
      %p143 = por %p141, %p142
      %p144 = scmp.ne.s32.totalorder %s136, %s139
      %p145 = scmp.eq.s32.totalorder %s23, 0
      %p146 = por %p144, %p145
      %p147 = scmp.ne.s32.totalorder %s136, %s139
      %p148 = scmp.eq.s32.totalorder %s28, 11
      %p149 = por %p147, %p148
      %p150 = scmp.ne.s32.totalorder %s139, %s140
      %p151 = scmp.eq.s32.totalorder %s28, 0
      %p152 = por %p150, %p151
      %p153 = scmp.ne.s32.totalorder %s139, %s140
      %p154 = scmp.eq.s32.totalorder %s29, 11
      %p155 = por %p153, %p154
      %p157 = scmp.ne.s32.totalorder %s140, %s156
      %p158 = scmp.eq.s32.totalorder %s29, 0
      %p159 = por %p157, %p158
      %s160 = ssub.s32 %s31, %s45
      %s161 = ssub.s32 %s30, %s49
      %s162 = sor.u32 %s160, %s161
      %p163 = scmp.eq.s32.totalorder %s162, 0
      %s165 = sadd.s32 %s164, 1
      %s166 = scalar_select %p163, %s164, %s165
      %p169 = pneg %p163
      %p170 = scmp.eq.s32.totalorder %s23, 11
      %p171 = por %p169, %p170
      %p172 = scmp.ne.s32.totalorder %s164, %s167
      %p173 = scmp.eq.s32.totalorder %s23, 0
      %p174 = por %p172, %p173
      %p175 = scmp.ne.s32.totalorder %s164, %s167
      %p176 = scmp.eq.s32.totalorder %s28, 11
      %p177 = por %p175, %p176
      %p178 = scmp.ne.s32.totalorder %s167, %s168
      %p179 = scmp.eq.s32.totalorder %s28, 0
      %p180 = por %p178, %p179
      %p181 = scmp.ne.s32.totalorder %s167, %s168
      %p182 = scmp.eq.s32.totalorder %s29, 11
      %p183 = por %p181, %p182
      %p185 = scmp.ne.s32.totalorder %s168, %s184
      %p186 = scmp.eq.s32.totalorder %s29, 0
      %p187 = por %p185, %p186
      %s188 = ssub.s32 %s31, %s45
      %s189 = ssub.s32 %s30, %s49
      %s190 = sor.u32 %s188, %s189
      %p191 = scmp.eq.s32.totalorder %s190, 0
      %s193 = sadd.s32 %s192, 1
      %s194 = scalar_select %p191, %s192, %s193
      %p197 = pneg %p191
      %p198 = scmp.eq.s32.totalorder %s23, 11
      %p199 = por %p197, %p198
      %p200 = scmp.ne.s32.totalorder %s192, %s195
      %p201 = scmp.eq.s32.totalorder %s23, 0
      %p202 = por %p200, %p201
      %p203 = scmp.ne.s32.totalorder %s192, %s195
      %p204 = scmp.eq.s32.totalorder %s28, 11
      %p205 = por %p203, %p204
      %p206 = scmp.ne.s32.totalorder %s195, %s196
      %p207 = scmp.eq.s32.totalorder %s28, 0
      %p208 = por %p206, %p207
      %p209 = scmp.ne.s32.totalorder %s195, %s196
      %p210 = scmp.eq.s32.totalorder %s29, 11
      %p211 = por %p209, %p210
      %p213 = scmp.ne.s32.totalorder %s196, %s212
      %p214 = scmp.eq.s32.totalorder %s29, 0
      %p215 = por %p213, %p214
      %p216 = scmp.le.s32.totalorder 1, %s23
      %p217 = scmp.lt.s32.totalorder %s23, 13
      %p218 = pnand %p216, %p217
      %p219 = pneg %p218
      // Predicated region
      $region9: #{tpu_custom_call.1} parent=5 // pred_check
        _
      $region10: #{tpu_custom_call.1} parent=5 // pred_check_branch
        %221 = sbr.rel (%p218) target = $region12
      $region11: #{tpu_custom_call.1} parent=5 // pred_region
        %s222 = ssub.s32 %s23, 1
      $region12: #{tpu_custom_call.1} parent=5 // pred_fallthru
        _
      %p223 = scmp.lt.s32.totalorder %s23, 12
      // Predicated region
      $region13: #{tpu_custom_call.1} parent=5 // pred_check
        %p224 = pneg %p223
      $region14: #{tpu_custom_call.1} parent=5 // pred_check_branch
        %226 = sbr.rel (%p224) target = $region16
      $region15: #{tpu_custom_call.1} parent=5 // pred_region
        // Predicated region
        $region17: #{tpu_custom_call.1} parent=15 // pred_check
          %p227 = pneg %p64
        $region18: #{tpu_custom_call.1} parent=15 // pred_check_branch
          %229 = sbr.rel (%p227) target = $region20
        $region19: #{tpu_custom_call.1} parent=15 // pred_region
          %s230 = sand.u32 %s54, 1
          %s231 = scalar_lea.sflag [#allocation5], %s230
          %s232 = sand.u32 %s54, 1
          %s233 = smul.addr %s232, 16
          %s234 = scalar_lea.vmem [#allocation4], %s233
          %s235 = smul.u32 2, %s31
          %s237 = ssub.s32 256, 256
          %238 = vsyncadd %s231, %s237
          %s239 = smul.addr %s235, 2
          %s240 = sadd.s32 %s32, %s239
          %s241 = smul.addr %s240, 128
          %s242 = scalar_lea.hbm %s0, %s241
          %s243 = sshll.u32 %s234, 4
          %s244 = int_to_ptr.vmem [resolvable:$true] %s243
          %249 = dma.hbm_to_vmem [thread:$0]  %s242, 256, %s244, %s231, 256, 128, 8
        $region20: #{tpu_custom_call.1} parent=15 // pred_fallthru
          _
        // Predicated region
        $region21: #{tpu_custom_call.1} parent=15 // pred_check
          %p250 = pneg %p92
        $region22: #{tpu_custom_call.1} parent=15 // pred_check_branch
          %252 = sbr.rel (%p250) target = $region24
        $region23: #{tpu_custom_call.1} parent=15 // pred_region
          %s253 = sand.u32 %s23, 1
          %s254 = scalar_lea.sflag [#allocation8], %s253
          %s255 = sand.u32 %s82, 1
          %s256 = smul.addr %s255, 128
          %s257 = scalar_lea.vmem [#allocation7], %s256
          %s258 = smul.u32 16, %s32
          %s260 = ssub.s32 2048, 2048
          %261 = vsyncadd %s254, %s260
          %s262 = smul.addr %s258, 2
          %s263 = sadd.s32 %s30, %s262
          %s264 = smul.addr %s263, 128
          %s265 = scalar_lea.hbm %s1, %s264
          %s266 = sshll.u32 %s257, 4
          %s267 = int_to_ptr.vmem [resolvable:$true] %s266
          %272 = dma.hbm_to_vmem [thread:$0]  %s265, 2048, %s267, %s254, 256, 128, 8
        $region24: #{tpu_custom_call.1} parent=15 // pred_fallthru
          _
        // Predicated region
        $region25: #{tpu_custom_call.1} parent=15 // pred_check
          %p273 = pneg %p120
        $region26: #{tpu_custom_call.1} parent=15 // pred_check_branch
          %275 = sbr.rel (%p273) target = $region28
        $region27: #{tpu_custom_call.1} parent=15 // pred_region
          %s276 = sand.u32 %s23, 1
          %s277 = scalar_lea.sflag [#allocation8], %s276
          %s278 = sand.u32 %s110, 1
          %s279 = smul.addr %s278, 128
          %s280 = scalar_lea.vmem [#allocation9], %s279
          %s281 = smul.u32 16, %s32
          %s283 = ssub.s32 2048, 2048
          %284 = vsyncadd %s277, %s283
          %s285 = smul.addr %s281, 2
          %s286 = sadd.s32 %s30, %s285
          %s287 = smul.addr %s286, 128
          %s288 = scalar_lea.hbm %s2, %s287
          %s289 = sshll.u32 %s280, 4
          %s290 = int_to_ptr.vmem [resolvable:$true] %s289
          %295 = dma.hbm_to_vmem [thread:$0]  %s288, 2048, %s290, %s277, 256, 128, 8
        $region28: #{tpu_custom_call.1} parent=15 // pred_fallthru
          _
        // Predicated region
        $region29: #{tpu_custom_call.1} parent=15 // pred_check
          %p296 = pneg %p146
        $region30: #{tpu_custom_call.1} parent=15 // pred_check_branch
          %298 = sbr.rel (%p296) target = $region32
        $region31: #{tpu_custom_call.1} parent=15 // pred_region
          %p299 = scmp.lt.s32.totalorder %s30, 1
          %s300 = scalar_select %p299, %s30, 1
          %s301 = scalar_lea.vmem %s3, %s300
        $region32: #{tpu_custom_call.1} parent=15 // pred_fallthru
          _
        // Predicated region
        $region33: #{tpu_custom_call.1} parent=15 // pred_check
          %p302 = pneg %p174
        $region34: #{tpu_custom_call.1} parent=15 // pred_check_branch
          %304 = sbr.rel (%p302) target = $region36
        $region35: #{tpu_custom_call.1} parent=15 // pred_region
          %s305 = sand.u32 %s164, 1
          %s306 = scalar_lea.sflag [#allocation11], %s305
          %s307 = sand.u32 %s164, 1
          %s308 = smul.addr %s307, 16
          %s309 = scalar_lea.vmem [#allocation10], %s308
          %s310 = smul.u32 2, %s31
          %s312 = ssub.s32 256, 256
          %313 = vsyncadd %s306, %s312
          %s314 = smul.addr %s310, 2
          %s315 = sadd.s32 %s30, %s314
          %s316 = smul.addr %s315, 128
          %s317 = scalar_lea.hbm %s4, %s316
          %s318 = sshll.u32 %s309, 4
          %s319 = int_to_ptr.vmem [resolvable:$true] %s318
          %324 = dma.hbm_to_vmem [thread:$0]  %s317, 256, %s319, %s306, 256, 128, 8
        $region36: #{tpu_custom_call.1} parent=15 // pred_fallthru
          _
      $region16: #{tpu_custom_call.1} parent=5 // pred_fallthru
        _
      %p325 = scmp.le.s32.totalorder 1, %s23
      %p326 = scmp.lt.s32.totalorder %s23, 13
      %p327 = pnand %p325, %p326
      %p328 = pneg %p327
      // Predicated region
      $region37: #{tpu_custom_call.1} parent=5 // pred_check
        _
      $region38: #{tpu_custom_call.1} parent=5 // pred_check_branch
        %330 = sbr.rel (%p327) target = $region40
      $region39: #{tpu_custom_call.1} parent=5 // pred_region
        %s331 = ssub.s32 %s23, 1
        %s332 = sand.u32 %s57, 1
        %s333 = scalar_lea.sflag [#allocation5], %s332
        %s334 = sand.u32 %s57, 1
        %s335 = smul.addr %s334, 16
        %s336 = scalar_lea.vmem [#allocation4], %s335
        // Predicated region
        $region41: #{tpu_custom_call.1} parent=39 // pred_check
          %p337 = pneg %p70
        $region42: #{tpu_custom_call.1} parent=39 // pred_check_branch
          %339 = sbr.rel (%p337) target = $region44
        $region43: #{tpu_custom_call.1} parent=39 // pred_region
          %340 = dma.done %s333, 256
        $region44: #{tpu_custom_call.1} parent=39 // pred_fallthru
          _
        %s341 = sand.u32 %s28, 1
        %s342 = scalar_lea.sflag [#allocation8], %s341
        %s343 = sand.u32 %s85, 1
        %s344 = smul.addr %s343, 128
        %s345 = scalar_lea.vmem [#allocation7], %s344
        // Predicated region
        $region45: #{tpu_custom_call.1} parent=39 // pred_check
          %p346 = pneg %p98
        $region46: #{tpu_custom_call.1} parent=39 // pred_check_branch
          %348 = sbr.rel (%p346) target = $region48
        $region47: #{tpu_custom_call.1} parent=39 // pred_region
          %349 = dma.done %s342, 2048
        $region48: #{tpu_custom_call.1} parent=39 // pred_fallthru
          _
        %s350 = sand.u32 %s28, 1
        %s351 = scalar_lea.sflag [#allocation8], %s350
        %s352 = sand.u32 %s113, 1
        %s353 = smul.addr %s352, 128
        %s354 = scalar_lea.vmem [#allocation9], %s353
        // Predicated region
        $region49: #{tpu_custom_call.1} parent=39 // pred_check
          %p355 = pneg %p126
        $region50: #{tpu_custom_call.1} parent=39 // pred_check_branch
          %357 = sbr.rel (%p355) target = $region52
        $region51: #{tpu_custom_call.1} parent=39 // pred_region
          %358 = dma.done %s351, 2048
        $region52: #{tpu_custom_call.1} parent=39 // pred_fallthru
          _
        %s359 = sand.u32 %s167, 1
        %s360 = scalar_lea.sflag [#allocation11], %s359
        %s361 = sand.u32 %s167, 1
        %s362 = smul.addr %s361, 16
        %s363 = scalar_lea.vmem [#allocation10], %s362
        // Predicated region
        $region53: #{tpu_custom_call.1} parent=39 // pred_check
          %p364 = pneg %p180
        $region54: #{tpu_custom_call.1} parent=39 // pred_check_branch
          %366 = sbr.rel (%p364) target = $region56
        $region55: #{tpu_custom_call.1} parent=39 // pred_region
          %367 = dma.done %s360, 256
        $region56: #{tpu_custom_call.1} parent=39 // pred_fallthru
          _
        %s368 = sand.u32 %s57, 1
        %s369 = scalar_lea.sflag [#allocation5], %s368
        %s370 = sand.u32 %s57, 1
        %s371 = smul.addr %s370, 16
        %s372 = scalar_lea.vmem [#allocation4], %s371
        %p373 = pneg %p70
        %p374 = pneg %p67
        %s375 = sand.u32 %s28, 1
        %s376 = scalar_lea.sflag [#allocation8], %s375
        %s377 = sand.u32 %s85, 1
        %s378 = smul.addr %s377, 128
        %s379 = scalar_lea.vmem [#allocation7], %s378
        %p380 = pneg %p98
        %p381 = pneg %p95
        %s382 = sand.u32 %s28, 1
        %s383 = scalar_lea.sflag [#allocation8], %s382
        %s384 = sand.u32 %s113, 1
        %s385 = smul.addr %s384, 128
        %s386 = scalar_lea.vmem [#allocation9], %s385
        %p387 = pneg %p126
        %p388 = pneg %p123
        %p389 = scmp.lt.s32.totalorder %s33, 1
        %s390 = scalar_select %p389, %s33, 1
        %s391 = scalar_lea.vmem %s3, %s390
        %p392 = pneg %p152
        %p393 = pneg %p149
        %s394 = sand.u32 %s167, 1
        %s395 = scalar_lea.sflag [#allocation11], %s394
        %s396 = sand.u32 %s167, 1
        %s397 = smul.addr %s396, 16
        %s398 = scalar_lea.vmem [#allocation10], %s397
        %p399 = pneg %p180
        %p400 = pneg %p177
        %p401 = pneg %p208
        %p402 = pneg %p205
        %s403 = sand.u32 %s195, 1
        %s404 = scalar_lea.sflag [#allocation6], %s403
        %s405 = sand.u32 %s195, 1
        %s406 = smul.addr %s405, 16
        %s407 = scalar_lea.vmem [#allocation12], %s406
        %s408 = smul.u32 2, %s34
        %s409 = smul.u32 16, %s35
        %s410 = smul.u32 16, %s35
        %p411 = scmp.lt.s32.totalorder %s33, 1
        %s412 = scalar_select %p411, %s33, 1
        %s413 = scalar_lea.vmem %s3, %s412
        %s414 = smul.u32 2, %s34
        %s415 = smul.u32 2, %s34
        %p416 = scmp.eq.s32.totalorder %s35, 0
        // Predicated region
        $region57: #{tpu_custom_call.1} parent=39 // pred_check
          %p417 = pneg %p416
        $region58: #{tpu_custom_call.1} parent=39 // pred_check_branch
          %419 = sbr.rel (%p417) target = $region60
        $region59: #{tpu_custom_call.1} parent=39 // pred_region
          %420 = vst [vmem:[#allocation2] sm:$0xff] 0.0
          %421 = vst [vmem:[#allocation2 + $0x8] sm:$0xff] 0.0
          %422 = vst [vmem:[#allocation3] sm:$0xff] 0.0
          %423 = vst [vmem:[#allocation3 + $0x8] sm:$0xff] 0.0
        $region60: #{tpu_custom_call.1} parent=39 // pred_fallthru
          _
        %v424 = vld [vmem:[%s336] sm:$0xff]
        %v425 = vld [vmem:[%s336 + $0x8] sm:$0xff]
        %v426 = vld [vmem:[#allocation2] sm:$0xff]
        %v427 = vld [vmem:[#allocation2 + $0x8] sm:$0xff]
        %v428 = vld [vmem:[%s345] sm:$0xff]
        %v429 = vld [vmem:[%s345 + $0x8] sm:$0xff]
        %v430 = vld [vmem:[%s345 + $0x10] sm:$0xff]
        %v431 = vld [vmem:[%s345 + $0x18] sm:$0xff]
        %v432 = vld [vmem:[%s345 + $0x20] sm:$0xff]
        %v433 = vld [vmem:[%s345 + $0x28] sm:$0xff]
        %v434 = vld [vmem:[%s345 + $0x30] sm:$0xff]
        %v435 = vld [vmem:[%s345 + $0x38] sm:$0xff]
        %v436 = vld [vmem:[%s345 + $0x40] sm:$0xff]
        %v437 = vld [vmem:[%s345 + $0x48] sm:$0xff]
        %v438 = vld [vmem:[%s345 + $0x50] sm:$0xff]
        %v439 = vld [vmem:[%s345 + $0x58] sm:$0xff]
        %v440 = vld [vmem:[%s345 + $0x60] sm:$0xff]
        %v441 = vld [vmem:[%s345 + $0x68] sm:$0xff]
        %v442 = vld [vmem:[%s345 + $0x70] sm:$0xff]
        %v443 = vld [vmem:[%s345 + $0x78] sm:$0xff]
        %444 = vmatprep.subr.mxu0 0.0
        %445 = vmatpush1.msra.mxu0 %v443
        %446 = vmatprep.subr.mxu0 0.0
        %447 = vmatpush1.msra.mxu0 %v442
        %448 = vmatprep.subr.mxu0 0.0
        %449 = vmatpush1.msra.mxu0 %v441
        %450 = vmatprep.subr.mxu0 0.0
        %451 = vmatpush1.msra.mxu0 %v440
        %452 = vmatprep.subr.mxu0 0.0
        %453 = vmatpush1.msra.mxu0 %v439
        %454 = vmatprep.subr.mxu0 0.0
        %455 = vmatpush1.msra.mxu0 %v438
        %456 = vmatprep.subr.mxu0 0.0
        %457 = vmatpush1.msra.mxu0 %v437
        %458 = vmatprep.subr.mxu0 0.0
        %459 = vmatpush1.msra.mxu0 %v436
        %460 = vmatprep.subr.mxu0 0.0
        %461 = vmatpush1.msra.mxu0 %v435
        %462 = vmatprep.subr.mxu0 0.0
        %463 = vmatpush1.msra.mxu0 %v434
        %464 = vmatprep.subr.mxu0 0.0
        %465 = vmatpush1.msra.mxu0 %v433
        %466 = vmatprep.subr.mxu0 0.0
        %467 = vmatpush1.msra.mxu0 %v432
        %468 = vmatprep.subr.mxu0 0.0
        %469 = vmatpush1.msra.mxu0 %v431
        %470 = vmatprep.subr.mxu0 0.0
        %471 = vmatpush1.msra.mxu0 %v430
        %472 = vmatprep.subr.mxu0 0.0
        %473 = vmatpush1.msra.mxu0 %v429
        %474 = vmatprep.subr.mxu0 0.0
        %475 = vmatpush1.msra.mxu0 %v428
        %476 = vmatprep.subr.mxu0 0.0
        %477 = vmatpush2.msra.mxu0 0.0
        %478 = vmatprep.subr.mxu0 0.0
        %479 = vmatpush2.msra.mxu0 0.0
        %480 = vmatprep.subr.mxu0 0.0
        %481 = vmatpush2.msra.mxu0 0.0
        %482 = vmatprep.subr.mxu0 0.0
        %483 = vmatpush2.msra.mxu0 0.0
        %484 = vmatprep.subr.mxu0 0.0
        %485 = vmatpush2.msra.mxu0 0.0
        %486 = vmatprep.subr.mxu0 0.0
        %487 = vmatpush2.msra.mxu0 0.0
        %488 = vmatprep.subr.mxu0 0.0
        %489 = vmatpush2.msra.mxu0 0.0
        %490 = vmatprep.subr.mxu0 0.0
        %491 = vmatpush2.msra.mxu0 0.0
        %492 = vmatprep.subr.mxu0 0.0
        %493 = vmatpush2.msra.mxu0 0.0
        %494 = vmatprep.subr.mxu0 0.0
        %495 = vmatpush2.msra.mxu0 0.0
        %496 = vmatprep.subr.mxu0 0.0
        %497 = vmatpush2.msra.mxu0 0.0
        %498 = vmatprep.subr.mxu0 0.0
        %499 = vmatpush2.msra.mxu0 0.0
        %500 = vmatprep.subr.mxu0 0.0
        %501 = vmatpush2.msra.mxu0 0.0
        %502 = vmatprep.subr.mxu0 0.0
        %503 = vmatpush2.msra.mxu0 0.0
        %504 = vmatprep.subr.mxu0 0.0
        %505 = vmatpush2.msra.mxu0 0.0
        %506 = vmatprep.subr.mxu0 0.0
        %507 = vmatpush2.msra.mxu0 0.0
        %508 = vmatprep.mubr.f32.mxu0 0.0
        %509 = vmatmul.mubr.f32.gmra.mxu0 %v424
        %v510 = vpop.f32.mrf.mxu0
        %v511 = vadd.f32 0.0, %v510
        %v512 = vpop.f32.mrf.mxu0
        %513 = vmatprep.mubr.f32.mxu0 0.0
        %514 = vmatmul.mubr.f32.gmra.mxu0 %v425
        %v515 = vpop.f32.mrf.mxu0
        %v516 = vadd.f32 0.0, %v515
        %v517 = vpop.f32.mrf.mxu0
        %518 = vdwg.mxu0
        %v519 = vadd.f32 %v426, %v511
        %v520 = vadd.f32 %v427, %v516
        %521 = vst [vmem:[#allocation2] sm:$0xff] %v519
        %522 = vst [vmem:[#allocation2 + $0x8] sm:$0xff] %v520
        %v523 = vld [vmem:[#allocation3] sm:$0xff]
        %v524 = vld [vmem:[#allocation3 + $0x8] sm:$0xff]
        %v525 = vmul.f32 %v424, %v424
        %v526 = vmul.f32 %v425, %v425
        %v527 = vld [vmem:[%s354] sm:$0xff]
        %v528 = vld [vmem:[%s354 + $0x8] sm:$0xff]
        %v529 = vld [vmem:[%s354 + $0x10] sm:$0xff]
        %v530 = vld [vmem:[%s354 + $0x18] sm:$0xff]
        %v531 = vld [vmem:[%s354 + $0x20] sm:$0xff]
        %v532 = vld [vmem:[%s354 + $0x28] sm:$0xff]
        %v533 = vld [vmem:[%s354 + $0x30] sm:$0xff]
        %v534 = vld [vmem:[%s354 + $0x38] sm:$0xff]
        %v535 = vld [vmem:[%s354 + $0x40] sm:$0xff]
        %v536 = vld [vmem:[%s354 + $0x48] sm:$0xff]
        %v537 = vld [vmem:[%s354 + $0x50] sm:$0xff]
        %v538 = vld [vmem:[%s354 + $0x58] sm:$0xff]
        %v539 = vld [vmem:[%s354 + $0x60] sm:$0xff]
        %v540 = vld [vmem:[%s354 + $0x68] sm:$0xff]
        %v541 = vld [vmem:[%s354 + $0x70] sm:$0xff]
        %v542 = vld [vmem:[%s354 + $0x78] sm:$0xff]
        %543 = vmatprep.subr.mxu0 0.0
        %544 = vmatpush1.msra.mxu0 %v542
        %545 = vmatprep.subr.mxu0 0.0
        %546 = vmatpush1.msra.mxu0 %v541
        %547 = vmatprep.subr.mxu0 0.0
        %548 = vmatpush1.msra.mxu0 %v540
        %549 = vmatprep.subr.mxu0 0.0
        %550 = vmatpush1.msra.mxu0 %v539
        %551 = vmatprep.subr.mxu0 0.0
        %552 = vmatpush1.msra.mxu0 %v538
        %553 = vmatprep.subr.mxu0 0.0
        %554 = vmatpush1.msra.mxu0 %v537
        %555 = vmatprep.subr.mxu0 0.0
        %556 = vmatpush1.msra.mxu0 %v536
        %557 = vmatprep.subr.mxu0 0.0
        %558 = vmatpush1.msra.mxu0 %v535
        %559 = vmatprep.subr.mxu0 0.0
        %560 = vmatpush1.msra.mxu0 %v534
        %561 = vmatprep.subr.mxu0 0.0
        %562 = vmatpush1.msra.mxu0 %v533
        %563 = vmatprep.subr.mxu0 0.0
        %564 = vmatpush1.msra.mxu0 %v532
        %565 = vmatprep.subr.mxu0 0.0
        %566 = vmatpush1.msra.mxu0 %v531
        %567 = vmatprep.subr.mxu0 0.0
        %568 = vmatpush1.msra.mxu0 %v530
        %569 = vmatprep.subr.mxu0 0.0
        %570 = vmatpush1.msra.mxu0 %v529
        %571 = vmatprep.subr.mxu0 0.0
        %572 = vmatpush1.msra.mxu0 %v528
        %573 = vmatprep.subr.mxu0 0.0
        %574 = vmatpush1.msra.mxu0 %v527
        %575 = vmatprep.subr.mxu0 0.0
        %576 = vmatpush2.msra.mxu0 0.0
        %577 = vmatprep.subr.mxu0 0.0
        %578 = vmatpush2.msra.mxu0 0.0
        %579 = vmatprep.subr.mxu0 0.0
        %580 = vmatpush2.msra.mxu0 0.0
        %581 = vmatprep.subr.mxu0 0.0
        %582 = vmatpush2.msra.mxu0 0.0
        %583 = vmatprep.subr.mxu0 0.0
        %584 = vmatpush2.msra.mxu0 0.0
        %585 = vmatprep.subr.mxu0 0.0
        %586 = vmatpush2.msra.mxu0 0.0
        %587 = vmatprep.subr.mxu0 0.0
        %588 = vmatpush2.msra.mxu0 0.0
        %589 = vmatprep.subr.mxu0 0.0
        %590 = vmatpush2.msra.mxu0 0.0
        %591 = vmatprep.subr.mxu0 0.0
        %592 = vmatpush2.msra.mxu0 0.0
        %593 = vmatprep.subr.mxu0 0.0
        %594 = vmatpush2.msra.mxu0 0.0
        %595 = vmatprep.subr.mxu0 0.0
        %596 = vmatpush2.msra.mxu0 0.0
        %597 = vmatprep.subr.mxu0 0.0
        %598 = vmatpush2.msra.mxu0 0.0
        %599 = vmatprep.subr.mxu0 0.0
        %600 = vmatpush2.msra.mxu0 0.0
        %601 = vmatprep.subr.mxu0 0.0
        %602 = vmatpush2.msra.mxu0 0.0
        %603 = vmatprep.subr.mxu0 0.0
        %604 = vmatpush2.msra.mxu0 0.0
        %605 = vmatprep.subr.mxu0 0.0
        %606 = vmatpush2.msra.mxu0 0.0
        %607 = vmatprep.mubr.f32.mxu0 0.0
        %608 = vmatmul.mubr.f32.gmra.mxu0 %v525
        %v609 = vpop.f32.mrf.mxu0
        %v610 = vadd.f32 0.0, %v609
        %v611 = vpop.f32.mrf.mxu0
        %612 = vmatprep.mubr.f32.mxu0 0.0
        %613 = vmatmul.mubr.f32.gmra.mxu0 %v526
        %v614 = vpop.f32.mrf.mxu0
        %v615 = vadd.f32 0.0, %v614
        %v616 = vpop.f32.mrf.mxu0
        %617 = vdwg.mxu0
        %v618 = vadd.f32 %v523, %v610
        %v619 = vadd.f32 %v524, %v615
        %620 = vst [vmem:[#allocation3] sm:$0xff] %v618
        %621 = vst [vmem:[#allocation3 + $0x8] sm:$0xff] %v619
        %p622 = scmp.eq.s32.totalorder %s35, 1
        // Predicated region
        $region61: #{tpu_custom_call.1} parent=39 // pred_check
          %p623 = pneg %p622
        $region62: #{tpu_custom_call.1} parent=39 // pred_check_branch
          %625 = sbr.rel (%p623) target = $region64
        $region63: #{tpu_custom_call.1} parent=39 // pred_region
          %v626 = vld [vmem:[#allocation2] sm:$0xff]
          %v627 = vld [vmem:[#allocation2 + $0x8] sm:$0xff]
          %v628 = vld [vmem:[%s413] sm:$0x1]
          %v630 = vlaneseq
          %v631 = vshrl.u32 %v630, 7
          %v632 = vsub.s32 0, %v631
          %v633 = vrot.slane %v628, %v632
          %v635 = vadd.f32 %v626, %v633
          %v636 = vadd.f32 %v627, %v633
          %v637 = vld [vmem:[#allocation3] sm:$0xff]
          %v638 = vld [vmem:[#allocation3 + $0x8] sm:$0xff]
          %v639 = vmax.f32 %v637, 0.0
          %v640 = vmax.f32 %v638, 0.0
          %v641 = vrsqrt.pop %v639
          %v642 = vmul.f32 %v639, %v641
          %vm643 = vcmp.eq.f32.partialorder %v639, inf
          %v644 = vsel %vm643, %v639, %v642
          %vm645 = vcmp.eq.f32.partialorder %v639, 0.0
          %v646 = vand.u32 %v639, 2147483648
          %v647 = vsel %vm645, %v646, %v644
          %v648 = vrsqrt.pop %v640
          %v649 = vmul.f32 %v640, %v648
          %vm650 = vcmp.eq.f32.partialorder %v640, inf
          %v651 = vsel %vm650, %v640, %v649
          %vm652 = vcmp.eq.f32.partialorder %v640, 0.0
          %v653 = vand.u32 %v640, 2147483648
          %v654 = vsel %vm652, %v653, %v651
          %v655 = vld [vmem:[%s363] sm:$0xff]
          %v656 = vld [vmem:[%s363 + $0x8] sm:$0xff]
          %v657 = vmul.f32 %v647, %v655
          %v658 = vmul.f32 %v654, %v656
          %v659 = vadd.f32 %v635, %v657
          %v660 = vadd.f32 %v636, %v658
          %661 = vst [vmem:[%s407] sm:$0xff] %v659
          %662 = vst [vmem:[%s407 + $0x8] sm:$0xff] %v660
        $region64: #{tpu_custom_call.1} parent=39 // pred_fallthru
          _
        %s663 = sand.u32 %s195, 1
        %s664 = scalar_lea.sflag [#allocation6], %s663
        %s665 = sand.u32 %s195, 1
        %s666 = smul.addr %s665, 16
        %s667 = scalar_lea.vmem [#allocation12], %s666
        // Predicated region
        $region65: #{tpu_custom_call.1} parent=39 // pred_check
          %p668 = pneg %p205
        $region66: #{tpu_custom_call.1} parent=39 // pred_check_branch
          %670 = sbr.rel (%p668) target = $region68
        $region67: #{tpu_custom_call.1} parent=39 // pred_region
          %s671 = smul.u32 2, %s34
          %s673 = ssub.s32 256, 256
          %674 = vsyncadd %s664, %s673
          %s675 = smul.addr %s671, 2
          %s676 = sadd.s32 %s33, %s675
          %s677 = smul.addr %s676, 128
          %s678 = scalar_lea.hbm %s5, %s677
          %s679 = sshll.u32 %s667, 4
          %s680 = int_to_ptr.vmem [resolvable:$true] %s679
          %685 = dma.vmem_to_hbm [thread:$0]  %s680, 256, %s678, %s664, 128, 256, 8
        $region68: #{tpu_custom_call.1} parent=39 // pred_fallthru
          _
      $region40: #{tpu_custom_call.1} parent=5 // pred_fallthru
        _
      %p686 = scmp.le.s32.totalorder 2, %s23
      // Predicated region
      $region69: #{tpu_custom_call.1} parent=5 // pred_check
        %p687 = pneg %p686
      $region70: #{tpu_custom_call.1} parent=5 // pred_check_branch
        %689 = sbr.rel (%p687) target = $region72
      $region71: #{tpu_custom_call.1} parent=5 // pred_region
        %s690 = ssub.s32 %s23, 2
        // Predicated region
        $region73: #{tpu_custom_call.1} parent=71 // pred_check
          %p691 = pneg %p211
        $region74: #{tpu_custom_call.1} parent=71 // pred_check_branch
          %693 = sbr.rel (%p691) target = $region76
        $region75: #{tpu_custom_call.1} parent=71 // pred_region
          %s694 = sand.u32 %s196, 1
          %s695 = scalar_lea.sflag [#allocation6], %s694
          %s696 = sand.u32 %s196, 1
          %s697 = smul.addr %s696, 16
          %s698 = scalar_lea.vmem [#allocation12], %s697
          %699 = dma.done %s695, 256
        $region76: #{tpu_custom_call.1} parent=71 // pred_fallthru
          _
      $region72: #{tpu_custom_call.1} parent=5 // pred_fallthru
        _
    $region6: #{tpu_custom_call.1} parent=1 // loop_footer
      %s27 = sadd.s32 1, %s23
    $region7: #{tpu_custom_call.1} parent=1 // loop_footer_branch
      %22 = sbr.rel target = $region3
    $region8: #{tpu_custom_call.1} parent=1 // loop_exit
      _
    %700 = vsyncpa [#allocation5], 1
    %s701 = scalar_lea.sflag [#allocation5], 1
    %702 = vsyncpa %s701, 1
    %703 = vsyncpa [#allocation8], 1
    %s704 = scalar_lea.sflag [#allocation8], 1
    %705 = vsyncpa %s704, 1
    %706 = vsyncpa [#allocation11], 1
    %s707 = scalar_lea.sflag [#allocation11], 1
    %708 = vsyncpa %s707, 1
    %709 = vsyncpa [#allocation6], 1
    %s710 = scalar_lea.sflag [#allocation6], 1
    %711 = vsyncpa %s710, 1

</llo_original>
